<compile_context>
chip_gen: v6e
topology: v6e:2x2x1
jax: 0.10.0
libtpu: 0.0.40
codegen_flags: <defaults>
</compile_context>

<pallas_src>
import functools
import math

import jax
import jax.numpy as jnp
from jax import lax
from jax.experimental import pallas as pl
from jax.experimental.pallas import tpu as pltpu

CURV_K = 1.0        # Lorentz manifold curvature parameter k (both manifolds)
EPS = 1e-8
MIN_RADIUS = 0.1    # half_aperture min_radius (MERU default)

ENTAIL_LANES = 128  # lane-dense packing width for per-row kernel outputs

# MXU operand dtype (accumulation stays float32).  bf16 runs at the native MXU
# rate on every generation and halves the feature DMA / resident imgT; set to
# jnp.float32 to recover bit-level parity with a float32 reference.
MATMUL_DTYPE = jnp.bfloat16


def _round_up(x, m):
    return ((x + m - 1) // m) * m


@functools.lru_cache(maxsize=1)
def _vmem_limit_bytes():
    """Scoped-VMEM budget: ~3/4 of physical, capped at 100 MiB.
    v5e/v6e (128 MiB) -> 96 MiB, v7x (64 MiB) -> 48 MiB, unknown -> 48 MiB."""
    cap = 64 * 1024 * 1024
    try:
        info = pltpu.get_tpu_info()
        cap = int(getattr(info, "vmem_capacity_bytes", cap))
    except Exception:
        pass
    return max(32 * 1024 * 1024, min((cap * 3) // 4, 100 * 1024 * 1024))


# ----------------------------------------------------------------------------
# Kernel 1: pixel normalization  (images - mean) / std  ==  images*inv + bias
# ----------------------------------------------------------------------------
def pixel_norm_kernel(x_ref, scale_ref, bias_ref, o_ref):
    # scale/bias are (tr, 1) per-row (per-channel) columns broadcast across the
    # spatial lanes: a single VALU FMA, no divide, no EUP, no broadcast slabs.
    o_ref[...] = x_ref[...] * scale_ref[...] + bias_ref[...]


def pixel_normalize(images, pixel_mean, pixel_std):
    B, C, H, W = images.shape
    rows, cols = B * C, H * W
    x2d = images.reshape(rows, cols).astype(jnp.float32)

    inv_std = (1.0 / pixel_std).astype(jnp.float32)            # (C,)
    bias_c = (-pixel_mean.astype(jnp.float32)) * inv_std       # (C,)
    scale_col = jnp.tile(inv_std, B)[:, None]                  # (rows, 1)
    bias_col = jnp.tile(bias_c, B)[:, None]                    # (rows, 1)

    tr = rows if rows <= 512 else 512        # multiple of 8 (or full dim)
    tl = cols if cols <= 2048 else 2048      # multiple of 128 (or full dim)
    grid = (pl.cdiv(rows, tr), pl.cdiv(cols, tl))

    out = pl.pallas_call(
        pixel_norm_kernel,
        out_shape=jax.ShapeDtypeStruct((rows, cols), jnp.float32),
        grid=grid,
        in_specs=[
            pl.BlockSpec((tr, tl), lambda i, j: (i, j)),
            pl.BlockSpec((tr, 1), lambda i, j: (i, 0)),
            pl.BlockSpec((tr, 1), lambda i, j: (i, 0)),
        ],
        out_specs=pl.BlockSpec((tr, tl), lambda i, j: (i, j)),
        compiler_params=pltpu.CompilerParams(
            dimension_semantics=("parallel", "parallel"),
            vmem_limit_bytes=_vmem_limit_bytes()),
    )(x2d, scale_col, bias_col)
    return out.reshape(B, C, H, W)


# ----------------------------------------------------------------------------
# Kernel 2: fused {visual, textual} LorentzLinear + LorentzNormalization
# ----------------------------------------------------------------------------
def lorentz_proj_kernel(x_ref, w_ref, b_ref, o_ref, *, k_out):
    x = x_ref[0]                      # (tb, Din_pad)        MATMUL_DTYPE
    w = w_ref[0]                      # (Din_pad, Dout_pad)  MATMUL_DTYPE
    b = b_ref[0]                      # (1, Dout_pad)        f32
    y = jnp.dot(x, w, preferred_element_type=jnp.float32) + b

    # LorentzLinear's time-coordinate recompute and the sqrt(k_out/k_in)
    # rescale are fully cancelled by LorentzNormalization: only the unit-
    # normalized space part and the constant time coordinate sqrt(1 + k)
    # survive.  The image branch (grid axis 0 == 0) emits its time coordinate
    # pre-negated so the loss kernel's plain dots are Lorentz inner products.
    is_time = lax.broadcasted_iota(jnp.int32, y.shape, 1) == 0
    y_space = jnp.where(is_time, 0.0, y)
    inv_norm = lax.rsqrt(jnp.sum(y_space * y_space, axis=-1, keepdims=True)
                         + 1e-24)
    t_const = math.sqrt(1.0 + k_out)
    t_val = jnp.where(pl.program_id(0) == 0, -t_const, t_const)
    o_ref[0] = jnp.where(is_time, t_val, y_space * inv_norm)


def lorentz_proj_lnorm_fused(x_img, x_txt, w_img, b_img, w_txt, b_txt,
                             k_out=CURV_K):
    """Project image and text features in ONE pallas_call (2-wide grid axis).

    Returns (image_feats_negt, text_feats): lane-dense (B, Dout_pad) float32
    Lorentz points; the image features have their time coordinate pre-negated.
    """
    B = x_img.shape[0]
    din_pad = _round_up(max(x_img.shape[1], x_txt.shape[1]), 128)
    dout_pad = _round_up(w_img.shape[1], 128)

    def padx(x):
        return jnp.pad(x.astype(jnp.float32), ((0, 0), (0, din_pad - x.shape[1])))

    def padw(w):
        return jnp.pad(w.astype(jnp.float32),
                       ((0, din_pad - w.shape[0]), (0, dout_pad - w.shape[1])))

    def padb(b):
        return jnp.pad(b.astype(jnp.float32), ((0, 0), (0, dout_pad - b.shape[1])))

    # MXU operands cast at the wrapper so the feature/weight DMA shrinks too;
    # bias stays f32 and is added after the f32-accumulated matmul.
    x_all = jnp.stack([padx(x_img), padx(x_txt)]).astype(MATMUL_DTYPE)
    w_all = jnp.stack([padw(w_img), padw(w_txt)]).astype(MATMUL_DTYPE)
    b_all = jnp.stack([padb(b_img), padb(b_txt)])             # (2, 1, Dout_pad)

    tb = B if B <= 512 else 512
    grid = (2, pl.cdiv(B, tb))

    out = pl.pallas_call(
        functools.partial(lorentz_proj_kernel, k_out=float(k_out)),
        out_shape=jax.ShapeDtypeStruct((2, B, dout_pad), jnp.float32),
        grid=grid,
        in_specs=[
            pl.BlockSpec((1, tb, din_pad), lambda m, b: (m, b, 0)),
            pl.BlockSpec((1, din_pad, dout_pad), lambda m, b: (m, 0, 0)),
            pl.BlockSpec((1, 1, dout_pad), lambda m, b: (m, 0, 0)),
        ],
        out_specs=pl.BlockSpec((1, tb, dout_pad), lambda m, b: (m, b, 0)),
        compiler_params=pltpu.CompilerParams(
            dimension_semantics=("parallel", "parallel"),
            vmem_limit_bytes=_vmem_limit_bytes()),
    )(x_all, w_all, b_all)
    # Lorentz points padded to 128 lanes (extra space coords are exactly zero),
    # consumed as-is by the loss kernel so all downstream loads stay lane-dense.
    return out[0], out[1]


# ----------------------------------------------------------------------------
# Kernel 3: row-tiled pairwise Lorentz distance logits + contrastive CE pieces
#           + entailment-angle inputs
# ----------------------------------------------------------------------------
def lclip_loss_kernel(txt_ref, img_ref, imgT_hbm, scale_ref,
                      entail_ref, colacc_ref, imgT_vmem, dma_sem,
                      *, k, eps):
    i = pl.program_id(1)

    @pl.when(i == 0)
    def _init():
        # One-shot copy of the (E, B) pre-negated/transposed image matrix into
        # a single VMEM buffer (constant across the row-tile loop, so no double
        # buffering), then reset the column online-LSE accumulator block.
        cp = pltpu.make_async_copy(imgT_hbm, imgT_vmem, dma_sem.at[0])
        cp.start()
        cp.wait()
        row = lax.broadcasted_iota(jnp.int32, colacc_ref.shape, 0)
        colacc_ref[...] = jnp.where(
            row == 0,
            jnp.full(colacc_ref.shape, -jnp.inf, jnp.float32),
            jnp.zeros(colacc_ref.shape, jnp.float32))

    txt = txt_ref[...]                   # (tq, E) f32 text rows of this tile
    img = img_ref[...]                   # (tq, E) f32 matching image rows (time negated)
    scale = scale_ref[0]
    inv_k = 1.0 / k
    c_sc = scale * math.sqrt(k)          # fold scale * sqrt(k) into one constant

    # L[r, b] = <txt_r, img_b>_L.  imgT's time row is pre-negated and it is
    # pre-transposed, so this is a plain (tq,E)x(E,B) MXU matmul (bf16 operands,
    # f32 accumulation) with no in-kernel transpose or sign pass.
    L = jnp.dot(txt.astype(imgT_vmem.dtype), imgT_vmem[...],
                preferred_element_type=jnp.float32)                    # (tq, B)

    # logits = -scale*sqrt(k)*arccosh(clamp(-<x,y>_L/k, min=1+eps)); the
    # (z-1)(z+1) form avoids cancellation near z = 1 (matched pairs).
    z = jnp.maximum(L * (-inv_k), 1.0 + eps)
    sl = -c_sc * jnp.log(z + jnp.sqrt((z - 1.0) * (z + 1.0)))          # (tq, B)

    # Row direction (classes = images): exact logsumexp, all columns resident.
    m1 = jnp.max(sl, axis=1, keepdims=True)
    lse_row = jnp.log(jnp.sum(jnp.exp(sl - m1), axis=1, keepdims=True)) + m1

    # Diagonal (matched-pair) Lorentz inner products straight from the already
    # loaded f32 row tiles: no iota/eye masking over the (tq, B) logits.
    xyl = jnp.sum(txt * img, axis=-1, keepdims=True)                   # (tq, 1)
    z_d = jnp.maximum(xyl * (-inv_k), 1.0 + eps)
    sl_diag = -c_sc * jnp.log(z_d + jnp.sqrt((z_d - 1.0) * (z_d + 1.0)))

    # Column direction (classes = texts): online logsumexp accumulated in the
    # per-core resident output block (row 0 = running max, row 1 = running sum).
    cmax = colacc_ref[0:1, :]
    csum = colacc_ref[1:2, :]
    tile_cmax = jnp.max(sl, axis=0, keepdims=True)                     # (1, B)
    new_max = jnp.maximum(cmax, tile_cmax)
    colacc_ref[1:2, :] = (csum * jnp.exp(cmax - new_max)
                          + jnp.sum(jnp.exp(sl - new_max), axis=0, keepdims=True))
    colacc_ref[0:1, :] = new_max

    # Entailment oxy_angle input.  Relies on lorentz_proj_lnorm_fused
    # invariants: |time| == sqrt(1+k) and unit space norm, so txt_t/img_t are
    # constants and the half-aperture is a constant handled in the wrapper.
    c_xyl = xyl * inv_k
    acos_num = math.sqrt(1.0 + k) * (1.0 + c_xyl)
    acos_den = jnp.sqrt(jnp.maximum((c_xyl - 1.0) * (c_xyl + 1.0), eps))
    acos_in = jnp.clip(acos_num / (acos_den + eps), -1.0 + eps, 1.0 - eps)

    # Per-row pieces packed into one lane-dense store:
    #   lane 0 = oxy-angle arccos input, lane 1 = lse_row - 2*diag_logit.
    lane = lax.broadcasted_iota(jnp.int32, entail_ref.shape, 1)
    entail_ref[...] = jnp.where(lane == 0, acos_in,
                                jnp.where(lane == 1, lse_row - 2.0 * sl_diag, 0.0))


def _choose_row_tile(batch, big_vmem):
    cap = 256 if big_vmem else 128       # tq=256 only with 128 MiB-class VMEM
    for t in (256, 128, 64, 32, 16, 8):
        if t <= cap and batch % t == 0:
            return t
    return batch   # small / odd batch: single full-row tile


def lclip_losses(image_feats_negt, text_feats, scale):
    """Inputs: (B, E_pad) f32 Lorentz points from lorentz_proj_lnorm_fused
    (image time coordinate pre-negated).  Returns (contrastive_loss, acos_in)."""
    B, E = image_feats_negt.shape
    vmem_limit = _vmem_limit_bytes()
    tq = _choose_row_tile(B, vmem_limit >= 80 * 1024 * 1024)
    n_tiles = max(B // tq, 1)
    # Split the row tiles across (up to) two TensorCores (v7x megacore); the
    # per-core column-LSE partials are merged by the JAX epilogue below.  On
    # single-core chips the extra grid axis is just a loop.
    ncores = 2 if (n_tiles >= 2 and n_tiles % 2 == 0) else 1
    npc = n_tiles // ncores

    # Transposed (E, B) image matrix in the MXU operand dtype; the time row is
    # already negated by kernel 2, so no elementwise sign pass is needed here.
    imgT = image_feats_negt.T.astype(MATMUL_DTYPE)

    kern = functools.partial(lclip_loss_kernel, k=float(CURV_K), eps=EPS)
    entail, colacc = pl.pallas_call(
        kern,
        out_shape=(jax.ShapeDtypeStruct((B, ENTAIL_LANES), jnp.float32),
                   jax.ShapeDtypeStruct((ncores * 8, B), jnp.float32)),
        grid=(ncores, npc),
        in_specs=[
            pl.BlockSpec((tq, E), lambda c, i: (c * npc + i, 0)),     # text rows
            pl.BlockSpec((tq, E), lambda c, i: (c * npc + i, 0)),     # image rows
            pl.BlockSpec(memory_space=pl.ANY),                        # imgT (HBM)
            pl.BlockSpec(memory_space=pltpu.MemorySpace.SMEM),        # logit scale
        ],
        out_specs=(
            pl.BlockSpec((tq, ENTAIL_LANES), lambda c, i: (c * npc + i, 0)),
            pl.BlockSpec((8, B), lambda c, i: (c, 0)),                # per-core resident
        ),
        scratch_shapes=[
            pltpu.VMEM((E, B), MATMUL_DTYPE),    # single-buffered resident imgT
            pltpu.SemaphoreType.DMA((1,)),
        ],
        compiler_params=pltpu.CompilerParams(
            dimension_semantics=("parallel", "arbitrary"),
            vmem_limit_bytes=vmem_limit),
    )(text_feats, image_feats_negt, imgT, scale)

    # Tiny JAX epilogue: merge per-core column logsumexp partials and assemble
    # the symmetric contrastive CE scalar.
    colacc = colacc.reshape(ncores, 8, B)
    cmax, csum = colacc[:, 0, :], colacc[:, 1, :]
    m = jnp.max(cmax, axis=0)
    col_lse = m + jnp.log(jnp.sum(csum * jnp.exp(cmax - m), axis=0))   # (B,)
    row_ce = entail[:, 1]                         # lse_row - 2*diag_logit, (B,)
    contrastive = (0.5 / B) * (jnp.sum(row_ce) + jnp.sum(col_lse))
    return contrastive, entail[:, 0]


# ----------------------------------------------------------------------------
# Glue: synthetic encoders + forward
# ----------------------------------------------------------------------------
def lift_to_lorentz(x, k=CURV_K):
    # Replace coordinate 0 by the Lorentz time coordinate sqrt(||x_space||^2 + k).
    space = x[:, 1:]
    time = jnp.sqrt(jnp.sum(space * space, axis=-1, keepdims=True) + k)
    return jnp.concatenate([time, space], axis=-1)


def encode_image_pre(images, params):
    x = pixel_normalize(images, params["pixel_mean"], params["pixel_std"])
    B = x.shape[0]
    # Synthetic stand-in for the external Lorentz visual encoder.
    feats = x.reshape(B, -1) @ params["w_visual_enc"]
    return lift_to_lorentz(feats)


def encode_text_pre(tokens, params, context_length):
    toks = []
    for t in tokens:
        if t.shape[0] > context_length:
            eot = t[-1]
            t = t[:context_length].at[-1].set(eot)
        toks.append(t)
    max_len = max(int(t.shape[0]) for t in toks)
    padded = jnp.stack([jnp.pad(t, (0, max_len - t.shape[0])) for t in toks])  # (B, L)
    # Synthetic stand-in for the external Lorentz textual encoder.
    tok_feats = params["text_embed"][padded]                                   # (B, L, W)
    eos_idx = jnp.argmax(padded, axis=-1)
    sel = tok_feats[jnp.arange(padded.shape[0]), eos_idx]                      # (B, W)
    return lift_to_lorentz(sel)


def lclip_forward(images, tokens, params, entail_weight=0.2, context_length=8):
    img_pre = encode_image_pre(images, params)
    txt_pre = encode_text_pre(tokens, params, context_length)

    # Fused visual + textual LorentzLinear projection + LorentzNormalization.
    image_feats_negt, text_feats = lorentz_proj_lnorm_fused(
        img_pre, txt_pre,
        params["w_visual_proj"], params["b_visual_proj"],
        params["w_textual_proj"], params["b_textual_proj"])

    # Single process: all_image_feats == image_feats, all_text_feats == text_feats.
    logit_scale = jnp.minimum(params["logit_scale"], 4.6052)
    scale = jnp.exp(logit_scale).reshape(1).astype(jnp.float32)

    contrastive, acos_in = lclip_losses(image_feats_negt, text_feats, scale)

    # TODO(synk): arccos/arcsin have no guaranteed Mosaic lowering; the tiny
    # per-sample angle finalization runs in plain JAX on the packed kernel output.
    angle = jnp.arccos(acos_in)
    # half_aperture(text) is a constant because LorentzNormalization makes every
    # text feature's space norm exactly 1 (asin input = 2*min_radius/sqrt(1/k)).
    asin_in = 2.0 * MIN_RADIUS / (math.sqrt(1.0 / CURV_K) + EPS)
    aperture = math.asin(min(max(asin_in, -1.0 + EPS), 1.0 - EPS))
    entailment = jnp.mean(jnp.maximum(angle - aperture, 0.0))

    loss = contrastive
    if entail_weight > 0:
        loss = loss + entail_weight * entailment
    return {"loss": loss,
            "logging": {"contrastive_loss": contrastive,
                        "entailment_loss": entailment,
                        "logit_scale": scale[0]}}


if __name__ == "__main__":
    key = jax.random.PRNGKey(0)
    ks = jax.random.split(key, 10)

    B, C, H, W = 8, 3, 16, 16
    visual_width, textual_width, embed_dim = 64, 48, 32
    vocab, context_length = 64, 8

    images = jax.random.uniform(ks[0], (B, C, H, W), jnp.float32)  # pixel values in [0, 1]

    lengths = [5, 10, 3, 7, 6, 8, 4, 2]   # variable-length token sequences
    tokens = []
    for i, L in enumerate(lengths):
        t = jax.random.randint(jax.random.fold_in(ks[1], i), (L,), 1, vocab - 1).astype(jnp.int32)
        t = t.at[-1].set(vocab - 1)        # EOT token = highest id (argmax convention)
        tokens.append(t)

    params = {
        "pixel_mean": jnp.array([0.485, 0.456, 0.406], jnp.float32),
        "pixel_std": jnp.array([0.229, 0.224, 0.225], jnp.float32),
        # synthetic encoder stand-ins
        "w_visual_enc": jax.random.normal(ks[2], (C * H * W, visual_width), jnp.float32)
                        * (C * H * W) ** -0.5,
        "text_embed": jax.random.normal(ks[3], (vocab, textual_width), jnp.float32) * 0.02,
        # LorentzLinear projections (weight std = width**-0.5 as in LCLIP.__init__)
        "w_visual_proj": jax.random.normal(ks[4], (visual_width, embed_dim), jnp.float32)
                         * visual_width ** -0.5,
        "b_visual_proj": jax.random.uniform(ks[5], (1, embed_dim), jnp.float32,
                                            -visual_width ** -0.5, visual_width ** -0.5),
        "w_textual_proj": jax.random.normal(ks[6], (textual_width, embed_dim), jnp.float32)
                          * textual_width ** -0.5,
        "b_textual_proj": jax.random.uniform(ks[7], (1, embed_dim), jnp.float32,
                                             -textual_width ** -0.5, textual_width ** -0.5),
        "logit_scale": jnp.log(jnp.array(1.0 / 0.07, jnp.float32)),
    }

    out = lclip_forward(images, tokens, params, entail_weight=0.2,
                        context_length=context_length)
    jax.block_until_ready(out["loss"])
    print("KERNEL_OK")
</pallas_src>

<mosaic_0001>
module attributes {stable_mosaic.version = 11 : i64} {
  func.func @pixel_norm_kernel(%arg0: i32, %arg1: i32, %arg2: memref<24x256xf32, #tpu.memory_space<vmem>>, %arg3: memref<24x1xf32, #tpu.memory_space<vmem>>, %arg4: memref<24x1xf32, #tpu.memory_space<vmem>>, %arg5: memref<24x256xf32, #tpu.memory_space<vmem>>) attributes {dimension_semantics = [#tpu.dimension_semantics<parallel>, #tpu.dimension_semantics<parallel>], iteration_bounds = array<i64: 1, 1>, scalar_prefetch = 0 : i64, scratch_operands = 0 : i64, tpu.core_type = #tpu.core_type<tc>, window_params = [{transform_indices = @transform_0, window_bounds = array<i64: 24, 256>}, {transform_indices = @transform_1, window_bounds = array<i64: 24, 1>}, {transform_indices = @transform_2, window_bounds = array<i64: 24, 1>}, {transform_indices = @transform_3, window_bounds = array<i64: 24, 256>}]} {
    %c0 = arith.constant 0 : index
    %c0_0 = arith.constant 0 : index
    %0 = vector.load %arg2[%c0, %c0_0] : memref<24x256xf32, #tpu.memory_space<vmem>>, vector<24x256xf32>
    %c0_1 = arith.constant 0 : index
    %c0_2 = arith.constant 0 : index
    %1 = vector.load %arg3[%c0_1, %c0_2] : memref<24x1xf32, #tpu.memory_space<vmem>>, vector<24x1xf32>
    %2 = vector.broadcast %1 : vector<24x1xf32> to vector<24x256xf32>
    %3 = arith.mulf %0, %2 : vector<24x256xf32>
    %c0_3 = arith.constant 0 : index
    %c0_4 = arith.constant 0 : index
    %4 = vector.load %arg4[%c0_3, %c0_4] : memref<24x1xf32, #tpu.memory_space<vmem>>, vector<24x1xf32>
    %5 = vector.broadcast %4 : vector<24x1xf32> to vector<24x256xf32>
    %6 = arith.addf %3, %5 : vector<24x256xf32>
    %c0_5 = arith.constant 0 : index
    %c0_6 = arith.constant 0 : index
    %7 = vector.load %arg5[%c0_5, %c0_6] : memref<24x256xf32, #tpu.memory_space<vmem>>, vector<24x256xf32>
    tpu.vector_store %arg5[%c0_5, %c0_6], %6 {strides = array<i32>} : memref<24x256xf32, #tpu.memory_space<vmem>>, vector<24x256xf32>,
    return
  }
  func.func @transform_0(%arg0: i32, %arg1: i32) -> (i32, i32) {
    %c0_i32 = arith.constant 0 : i32
    return %arg0, %arg1 : i32, i32
  }
  func.func @transform_1(%arg0: i32, %arg1: i32) -> (i32, i32) {
    %c0_i32 = arith.constant 0 : i32
    %c0_i32_0 = arith.constant 0 : i32
    return %arg0, %c0_i32 : i32, i32
  }
  func.func @transform_2(%arg0: i32, %arg1: i32) -> (i32, i32) {
    %c0_i32 = arith.constant 0 : i32
    %c0_i32_0 = arith.constant 0 : i32
    return %arg0, %c0_i32 : i32, i32
  }
  func.func @transform_3(%arg0: i32, %arg1: i32) -> (i32, i32) {
    %c0_i32 = arith.constant 0 : i32
    return %arg0, %arg1 : i32, i32
  }
}

</mosaic_0001>

<llo_original>
// kernel: tpu_custom_call.1
$region0: #{tpu_custom_call.1}
  #allocation0 [shape = 'u32[]', space=smem, size = 0x4, offset = 0x4, fixed_abs, tag = 'smem constant byte address 0x4 - core index']
  #allocation1 [shape = 'u32[144,128]{1,0:T(1,128)}', space=vmem, size = 0x12000, scoped, tag = 'internal scratch']
  %s0 = inlined_call_operand.vmem [shape: f32[24,256], index: 0, kind: input, shape index: {}]
  %s1 = inlined_call_operand.vmem [shape: f32[24,1], index: 1, kind: input, shape index: {}]
  %s2 = inlined_call_operand.vmem [shape: f32[24,1], index: 2, kind: input, shape index: {}]
  %s3 = inlined_call_operand.hbm [shape: f32[24,256], index: 3, kind: output, shape index: {}]
  %s4 = sld [smem:[#allocation0]]
  $region22: #{tpu_custom_call.1} parent=0
    _
  %s6 = ssub.s32 1, %s4
  %s7 = scalar_select 0, %s6, %s4
  $region1: #{tpu_custom_call.1} parent=0
    #allocation2 [shape = 'u8[24576]{0}', space=vmem, size = 0x6000, scoped, tag = 'output window, operand 0, single buffered']
    #allocation3 [shape = 's32[1]{0}', space=sflag, size = 0x4, scoped, tag = 'scoped memory for tpu_custom_call.1']
    %8 = vsyncpa [#allocation3], 0
    // Predicated region
    $region2: #{tpu_custom_call.1} parent=1 // pred_check
      _
    $region3: #{tpu_custom_call.1} parent=1 // pred_check_branch
      %10 = sbr.rel (0) target = $region5
    $region4: #{tpu_custom_call.1} parent=1 // pred_region
      _
    $region5: #{tpu_custom_call.1} parent=1 // pred_fallthru
      _
    // Predicated region
    $region6: #{tpu_custom_call.1} parent=1 // pred_check
      _
    $region7: #{tpu_custom_call.1} parent=1 // pred_check_branch
      %12 = sbr.rel (0) target = $region9
    $region8: #{tpu_custom_call.1} parent=1 // pred_region
      _
    $region9: #{tpu_custom_call.1} parent=1 // pred_fallthru
      _
    // Predicated region
    $region10: #{tpu_custom_call.1} parent=1 // pred_check
      _
    $region11: #{tpu_custom_call.1} parent=1 // pred_check_branch
      %14 = sbr.rel (0) target = $region13
    $region12: #{tpu_custom_call.1} parent=1 // pred_region
      _
    $region13: #{tpu_custom_call.1} parent=1 // pred_fallthru
      _
    %v15 = vld [vmem:[%s0] sm:$0xff]
    %v16 = vld [vmem:[%s0 + $0x8] sm:$0xff]
    %v17 = vld [vmem:[%s0 + $0x10] sm:$0xff]
    %v18 = vld [vmem:[%s0 + $0x18] sm:$0xff]
    %v19 = vld [vmem:[%s0 + $0x20] sm:$0xff]
    %v20 = vld [vmem:[%s0 + $0x28] sm:$0xff]
    %v21 = vld [vmem:[%s1] sm:$0xff]
    %v22 = vld [vmem:[%s1 + $0x8] sm:$0xff]
    %v23 = vld [vmem:[%s1 + $0x10] sm:$0xff]
    %25 = vset.pattern.permute.xlu0 0
    %26 = vperm.xlu0 %25, %v21
    %v27 = vpop.permute.xlu0 %26
    %30 = vset.pattern.permute.xlu0 0
    %31 = vperm.xlu0 %30, %v22
    %v32 = vpop.permute.xlu0 %31
    %35 = vset.pattern.permute.xlu0 0
    %36 = vperm.xlu0 %35, %v23
    %v37 = vpop.permute.xlu0 %36
    %v39 = vmul.f32 %v15, %v27
    %v40 = vmul.f32 %v16, %v27
    %v41 = vmul.f32 %v17, %v32
    %v42 = vmul.f32 %v18, %v32
    %v43 = vmul.f32 %v19, %v37
    %v44 = vmul.f32 %v20, %v37
    %v45 = vld [vmem:[%s2] sm:$0xff]
    %v46 = vld [vmem:[%s2 + $0x8] sm:$0xff]
    %v47 = vld [vmem:[%s2 + $0x10] sm:$0xff]
    %49 = vset.pattern.permute.xlu0 0
    %50 = vperm.xlu0 %49, %v45
    %v51 = vpop.permute.xlu0 %50
    %54 = vset.pattern.permute.xlu0 0
    %55 = vperm.xlu0 %54, %v46
    %v56 = vpop.permute.xlu0 %55
    %59 = vset.pattern.permute.xlu0 0
    %60 = vperm.xlu0 %59, %v47
    %v61 = vpop.permute.xlu0 %60
    %v63 = vadd.f32 %v39, %v51
    %v64 = vadd.f32 %v40, %v51
    %v65 = vadd.f32 %v41, %v56
    %v66 = vadd.f32 %v42, %v56
    %v67 = vadd.f32 %v43, %v61
    %v68 = vadd.f32 %v44, %v61
    %69 = vst [vmem:[#allocation2] sm:$0xff] %v63
    %70 = vst [vmem:[#allocation2 + $0x8] sm:$0xff] %v64
    %71 = vst [vmem:[#allocation2 + $0x10] sm:$0xff] %v65
    %72 = vst [vmem:[#allocation2 + $0x18] sm:$0xff] %v66
    %73 = vst [vmem:[#allocation2 + $0x20] sm:$0xff] %v67
    %74 = vst [vmem:[#allocation2 + $0x28] sm:$0xff] %v68
    // Predicated region
    $region14: #{tpu_custom_call.1} parent=1 // pred_check
      _
    $region15: #{tpu_custom_call.1} parent=1 // pred_check_branch
      %76 = sbr.rel (0) target = $region17
    $region16: #{tpu_custom_call.1} parent=1 // pred_region
      %s78 = ssub.s32 768, 768
      %79 = vsyncadd [#allocation3], %s78
      %s80 = sshll.u32 [#allocation2], 4
      %s81 = int_to_ptr.vmem [resolvable:$true] %s80
      %86 = dma.vmem_to_hbm [thread:$0]  %s81, 768, %s3, [#allocation3], 256, 256, 16
    $region17: #{tpu_custom_call.1} parent=1 // pred_fallthru
      _
    // Predicated region
    $region18: #{tpu_custom_call.1} parent=1 // pred_check
      _
    $region19: #{tpu_custom_call.1} parent=1 // pred_check_branch
      %88 = sbr.rel (0) target = $region21
    $region20: #{tpu_custom_call.1} parent=1 // pred_region
      %89 = dma.done [#allocation3], 768
    $region21: #{tpu_custom_call.1} parent=1 // pred_fallthru
      _
    %90 = vsyncpa [#allocation3], 1

</llo_original>
